<compile_context>
chip_gen: v5e
topology: v5e:2x2
jax: 0.10.0
libtpu: 0.0.40
codegen_flags: <defaults>
</compile_context>

<pallas_src>
import numpy as np
import jax
import jax.numpy as jnp
from jax.experimental import pallas as pl
from jax.experimental.pallas import tpu as pltpu


def _get_rho(sigma):
    # rho such that softplus(rho) == sigma
    return float(np.log(np.expm1(sigma) + 1e-20))


def _bayes_kernel(prior_ref, mu_ref, rho_ref, eps_ref, samp_ref, klp_ref, kl_acc):
    """One grid step processes a (tile_rows, C) tile.

    prior_ref : SMEM (4,) -> [prior_mu, prior_sigma, log(prior_sigma), 1/(2*prior_sigma^2)]
    mu_ref    : VMEM tile of the mean parameters
    rho_ref   : VMEM tile of the rho parameters
    eps_ref   : VMEM tile of standard-normal noise
    samp_ref  : VMEM tile of the output sample
    klp_ref   : (1, 8, 128) per-slab partial-KL output (written on last inner step)
    kl_acc    : (8, 128) VMEM scratch accumulator (VPU-only adds)
    """
    t = pl.program_id(1)   # inner ("arbitrary") accumulation axis within a slab

    @pl.when(t == 0)
    def _():
        kl_acc[...] = jnp.zeros_like(kl_acc)

    mu = mu_ref[...]
    rho = rho_ref[...]

    # Numerically-safe softplus (matches torch's threshold=20 behaviour).
    sigma = jnp.where(rho > 20.0, rho,
                      jnp.log1p(jnp.exp(jnp.minimum(rho, 20.0))))

    # Reparameterized sample.
    samp_ref[...] = (mu + sigma * eps_ref[...]).astype(samp_ref.dtype)

    # KL(N(mu, sigma) || N(prior_mu, prior_sigma)) elementwise, with hoisted
    # prior constants (no divide, no per-step scalar log).
    pm = prior_ref[0]
    log_ps = prior_ref[2]
    inv_2ps2 = prior_ref[3]
    d = mu - pm
    kl_elem = log_ps - jnp.log(sigma) + (sigma * sigma + d * d) * inv_2ps2 - 0.5

    # VPU-only accumulation into the (8,128) vreg-shaped accumulator:
    #   (T, C) -> (T//8, 8, C) is a layout-free split of the sublane-major axis,
    #   summing over axis 0 is pure vreg adds; lane tiles are folded with
    #   statically aligned slices.
    T, C = kl_elem.shape
    partial = kl_elem.reshape(T // 8, 8, C).sum(axis=0)      # (8, C)
    for j in range(C // 128):
        kl_acc[...] += partial[:, j * 128:(j + 1) * 128]

    @pl.when(t == pl.num_programs(1) - 1)
    def _():
        klp_ref[0] = kl_acc[...]


def bayesian_parameterization_forward(mu, rho, eps, prior_mu, prior_sigma,
                                      *, max_block_bytes=2 * 1024 * 1024):
    """Returns (sampled_params, kl_loss_scalar)."""
    assert mu.shape == rho.shape == eps.shape
    assert mu.ndim == 2
    R, C = mu.shape
    assert R % 8 == 0 and C % 128 == 0, "shape must be TPU tile friendly"
    # TODO(synk): extremely wide C would want a second (column) grid axis; not needed here.

    # ---- block-size selection: biggest row-multiple-of-8 divisor of R whose
    # ---- (tile_rows, C) f32 block stays under ~max_block_bytes (1-4 MiB sweet spot).
    bytes_per_row = C * 4
    max_rows = max(8, (max_block_bytes // bytes_per_row) // 8 * 8)
    tile_rows = 8
    for r in range(16, min(R, max_rows) + 1, 8):
        if R % r == 0:
            tile_rows = r
    n_tiles = R // tile_rows

    # Outer "parallel" axis over row slabs -> both TensorCores on v7x; harmless
    # (sequential) on single-TC v5e/v6e.
    n_slabs = 2 if (n_tiles % 2 == 0 and n_tiles >= 2) else 1
    tiles_per_slab = n_tiles // n_slabs

    prior_sigma_f = float(prior_sigma)
    prior = jnp.array(
        [float(prior_mu),
         prior_sigma_f,
         float(np.log(prior_sigma_f)),
         float(1.0 / (2.0 * prior_sigma_f * prior_sigma_f))],
        dtype=jnp.float32)

    data_spec = pl.BlockSpec((tile_rows, C),
                             lambda s, t: (s * tiles_per_slab + t, 0))

    sampled, kl_part = pl.pallas_call(
        _bayes_kernel,
        out_shape=(jax.ShapeDtypeStruct((R, C), mu.dtype),
                   jax.ShapeDtypeStruct((n_slabs, 8, 128), jnp.float32)),
        grid_spec=pltpu.PrefetchScalarGridSpec(
            num_scalar_prefetch=0,
            grid=(n_slabs, tiles_per_slab),
            in_specs=[pl.BlockSpec(memory_space=pltpu.MemorySpace.SMEM),  # prior consts
                      data_spec,    # mu
                      data_spec,    # rho
                      data_spec],   # eps
            out_specs=[data_spec,                                          # sampled
                       pl.BlockSpec((1, 8, 128), lambda s, t: (s, 0, 0))], # per-slab KL
            scratch_shapes=[pltpu.VMEM((8, 128), jnp.float32)]),
        compiler_params=pltpu.CompilerParams(
            dimension_semantics=("parallel", "arbitrary")),
    )(prior, mu, rho, eps)

    # Tiny final reduction of per-slab / per-lane partials.
    return sampled, jnp.sum(kl_part)


def _reference(mu, rho, eps, prior_mu, prior_sigma):
    sigma = jax.nn.softplus(rho)
    sampled = mu + sigma * eps
    kl = jnp.sum(jnp.log(prior_sigma) - jnp.log(sigma)
                 + (sigma ** 2 + (mu - prior_mu) ** 2) / (2.0 * prior_sigma ** 2)
                 - 0.5)
    return sampled, kl


if __name__ == "__main__":
    # ---- deterministic parameter construction (mirrors __init__) ----
    posterior_sigma_init = 0.0486
    prior_mu = 0.0
    prior_sigma = 1.0
    rho_init = _get_rho(posterior_sigma_init)

    def make_inputs(key, R, C):
        k_mu, k_rho, k_eps = jax.random.split(key, 3)
        mu = 0.1 * jax.random.normal(k_mu, (R, C), dtype=jnp.float32)
        rho = rho_init + 0.1 * jax.random.normal(k_rho, (R, C), dtype=jnp.float32)
        eps = jax.random.normal(k_eps, (R, C), dtype=jnp.float32)
        return mu, rho, eps

    key = jax.random.PRNGKey(0)
    k1, k2 = jax.random.split(key)

    # Case 1: small parameter tensor -> single block, single grid step.
    mu, rho, eps = make_inputs(k1, 32, 128)
    sampled, kl = bayesian_parameterization_forward(mu, rho, eps, prior_mu, prior_sigma)
    sampled = jax.block_until_ready(sampled)
    kl = jax.block_until_ready(kl)
    s_ref, kl_ref = _reference(mu, rho, eps, prior_mu, prior_sigma)
    assert np.allclose(np.asarray(sampled), np.asarray(s_ref),
                       rtol=1e-4, atol=1e-4), "sampled values mismatch (case 1)"
    assert np.allclose(float(kl), float(kl_ref),
                       rtol=1e-3, atol=1e-2), "kl mismatch (case 1)"

    # Case 2: force a multi-tile grid (2 parallel slabs x 2 accumulation steps)
    # by shrinking the block budget, to exercise the accumulator / partial-KL path.
    mu, rho, eps = make_inputs(k2, 64, 128)
    sampled, kl = bayesian_parameterization_forward(
        mu, rho, eps, prior_mu, prior_sigma, max_block_bytes=16 * 128 * 4)
    sampled = jax.block_until_ready(sampled)
    kl = jax.block_until_ready(kl)
    s_ref, kl_ref = _reference(mu, rho, eps, prior_mu, prior_sigma)
    assert np.allclose(np.asarray(sampled), np.asarray(s_ref),
                       rtol=1e-4, atol=1e-4), "sampled values mismatch (case 2)"
    assert np.allclose(float(kl), float(kl_ref),
                       rtol=1e-3, atol=1e-2), "kl mismatch (case 2)"

    print("KERNEL_OK")
</pallas_src>

<mosaic_0001>
module attributes {stable_mosaic.version = 11 : i64} {
  func.func @_bayes_kernel(%arg0: i32, %arg1: i32, %arg2: memref<4xf32, #tpu.memory_space<smem>>, %arg3: memref<32x128xf32, #tpu.memory_space<vmem>>, %arg4: memref<32x128xf32, #tpu.memory_space<vmem>>, %arg5: memref<32x128xf32, #tpu.memory_space<vmem>>, %arg6: memref<32x128xf32, #tpu.memory_space<vmem>>, %arg7: memref<1x8x128xf32, #tpu.memory_space<vmem>>, %arg8: memref<8x128xf32, #tpu.memory_space<vmem>>) attributes {dimension_semantics = [#tpu.dimension_semantics<parallel>, #tpu.dimension_semantics<arbitrary>], iteration_bounds = array<i64: 1, 1>, scalar_prefetch = 0 : i64, scratch_operands = 1 : i64, tpu.core_type = #tpu.core_type<tc>, window_params = [{transform_indices = @transform_0, window_bounds = array<i64: 4>}, {transform_indices = @transform_1, window_bounds = array<i64: 32, 128>}, {transform_indices = @transform_2, window_bounds = array<i64: 32, 128>}, {transform_indices = @transform_3, window_bounds = array<i64: 32, 128>}, {transform_indices = @transform_4, window_bounds = array<i64: 32, 128>}, {transform_indices = @transform_5, window_bounds = array<i64: 1, 8, 128>}]} {
    %c0_i32 = arith.constant 0 : i32
    %0 = arith.cmpi eq, %arg1, %c0_i32 : i32
    %1 = arith.extui %0 : i1 to i32
    %c0_i32_0 = arith.constant 0 : i32
    %2 = arith.cmpi ne, %1, %c0_i32_0 : i32
    scf.if %2 {
      %cst_18 = arith.constant 0.000000e+00 : f32
      %40 = vector.broadcast %cst_18 : f32 to vector<8x128xf32>
      %c0_19 = arith.constant 0 : index
      %c0_20 = arith.constant 0 : index
      %41 = vector.load %arg8[%c0_19, %c0_20] : memref<8x128xf32, #tpu.memory_space<vmem>>, vector<8x128xf32>
      tpu.vector_store %arg8[%c0_19, %c0_20], %40 {strides = array<i32>} : memref<8x128xf32, #tpu.memory_space<vmem>>, vector<8x128xf32>,
    } else {
    }
    %c0 = arith.constant 0 : index
    %c0_1 = arith.constant 0 : index
    %3 = vector.load %arg3[%c0, %c0_1] : memref<32x128xf32, #tpu.memory_space<vmem>>, vector<32x128xf32>
    %c0_2 = arith.constant 0 : index
    %c0_3 = arith.constant 0 : index
    %4 = vector.load %arg4[%c0_2, %c0_3] : memref<32x128xf32, #tpu.memory_space<vmem>>, vector<32x128xf32>
    %cst = arith.constant 2.000000e+01 : f32
    %5 = vector.broadcast %cst : f32 to vector<32x128xf32>
    %6 = arith.cmpf ogt, %4, %5 : vector<32x128xf32>
    %cst_4 = arith.constant 2.000000e+01 : f32
    %7 = vector.broadcast %cst_4 : f32 to vector<32x128xf32>
    %8 = arith.minimumf %4, %7 : vector<32x128xf32>
    %9 = math.exp %8 : vector<32x128xf32>
    %10 = math.log1p %9 : vector<32x128xf32>
    %11 = arith.select %6, %4, %10 : vector<32x128xi1>, vector<32x128xf32>
    %c0_5 = arith.constant 0 : index
    %c0_6 = arith.constant 0 : index
    %12 = vector.load %arg5[%c0_5, %c0_6] : memref<32x128xf32, #tpu.memory_space<vmem>>, vector<32x128xf32>
    %13 = arith.mulf %11, %12 : vector<32x128xf32>
    %14 = arith.addf %3, %13 : vector<32x128xf32>
    %c0_7 = arith.constant 0 : index
    %c0_8 = arith.constant 0 : index
    %15 = vector.load %arg6[%c0_7, %c0_8] : memref<32x128xf32, #tpu.memory_space<vmem>>, vector<32x128xf32>
    tpu.vector_store %arg6[%c0_7, %c0_8], %14 {strides = array<i32>} : memref<32x128xf32, #tpu.memory_space<vmem>>, vector<32x128xf32>,
    %c0_9 = arith.constant 0 : index
    %16 = memref.load %arg2[%c0_9] : memref<4xf32, #tpu.memory_space<smem>>
    %c2 = arith.constant 2 : index
    %17 = memref.load %arg2[%c2] : memref<4xf32, #tpu.memory_space<smem>>
    %c3 = arith.constant 3 : index
    %18 = memref.load %arg2[%c3] : memref<4xf32, #tpu.memory_space<smem>>
    %19 = vector.broadcast %16 : f32 to vector<32x128xf32>
    %20 = arith.subf %3, %19 : vector<32x128xf32>
    %21 = math.log %11 : vector<32x128xf32>
    %22 = vector.broadcast %17 : f32 to vector<32x128xf32>
    %23 = arith.subf %22, %21 : vector<32x128xf32>
    %24 = arith.mulf %11, %11 : vector<32x128xf32>
    %25 = arith.mulf %20, %20 : vector<32x128xf32>
    %26 = arith.addf %24, %25 : vector<32x128xf32>
    %27 = vector.broadcast %18 : f32 to vector<32x128xf32>
    %28 = arith.mulf %26, %27 : vector<32x128xf32>
    %29 = arith.addf %23, %28 : vector<32x128xf32>
    %cst_10 = arith.constant 5.000000e-01 : f32
    %30 = vector.broadcast %cst_10 : f32 to vector<32x128xf32>
    %31 = arith.subf %29, %30 : vector<32x128xf32>
    %32 = vector.shape_cast %31 : vector<32x128xf32> to vector<4x8x128xf32>
    %cst_11 = arith.constant dense<0.000000e+00> : vector<8x128xf32>
    %33 = vector.multi_reduction <add>, %32, %cst_11 [0] : vector<4x8x128xf32> to vector<8x128xf32>
    %c0_12 = arith.constant 0 : index
    %c0_13 = arith.constant 0 : index
    %34 = vector.load %arg8[%c0_12, %c0_13] : memref<8x128xf32, #tpu.memory_space<vmem>>, vector<8x128xf32>
    %35 = arith.addf %34, %33 : vector<8x128xf32>
    %c0_14 = arith.constant 0 : index
    %c0_15 = arith.constant 0 : index
    %36 = vector.load %arg8[%c0_14, %c0_15] : memref<8x128xf32, #tpu.memory_space<vmem>>, vector<8x128xf32>
    tpu.vector_store %arg8[%c0_14, %c0_15], %35 {strides = array<i32>} : memref<8x128xf32, #tpu.memory_space<vmem>>, vector<8x128xf32>,
    %c0_i32_16 = arith.constant 0 : i32
    %37 = arith.cmpi eq, %arg1, %c0_i32_16 : i32
    %38 = arith.extui %37 : i1 to i32
    %c0_i32_17 = arith.constant 0 : i32
    %39 = arith.cmpi ne, %38, %c0_i32_17 : i32
    scf.if %39 {
      %c0_18 = arith.constant 0 : index
      %c0_19 = arith.constant 0 : index
      %40 = vector.load %arg8[%c0_18, %c0_19] : memref<8x128xf32, #tpu.memory_space<vmem>>, vector<8x128xf32>
      %c0_20 = arith.constant 0 : index
      %c0_21 = arith.constant 0 : index
      %c0_22 = arith.constant 0 : index
      %41 = vector.load %arg7[%c0_20, %c0_21, %c0_22] : memref<1x8x128xf32, #tpu.memory_space<vmem>>, vector<1x8x128xf32>
      %42 = vector.shape_cast %41 : vector<1x8x128xf32> to vector<8x128xf32>
      %43 = vector.shape_cast %40 : vector<8x128xf32> to vector<1x8x128xf32>
      tpu.vector_store %arg7[%c0_20, %c0_21, %c0_22], %43 {strides = array<i32>} : memref<1x8x128xf32, #tpu.memory_space<vmem>>, vector<1x8x128xf32>,
    } else {
    }
    return
  }
  func.func @transform_0(%arg0: i32, %arg1: i32) -> i32 {
    %c0_i32 = arith.constant 0 : i32
    %c0_i32_0 = arith.constant 0 : i32
    return %c0_i32 : i32
  }
  func.func @transform_1(%arg0: i32, %arg1: i32) -> (i32, i32) {
    %c1_i32 = arith.constant 1 : i32
    %0 = arith.muli %arg0, %c1_i32 : i32
    %1 = arith.addi %0, %arg1 : i32
    %c0_i32 = arith.constant 0 : i32
    %c0_i32_0 = arith.constant 0 : i32
    return %1, %c0_i32 : i32, i32
  }
  func.func @transform_2(%arg0: i32, %arg1: i32) -> (i32, i32) {
    %c1_i32 = arith.constant 1 : i32
    %0 = arith.muli %arg0, %c1_i32 : i32
    %1 = arith.addi %0, %arg1 : i32
    %c0_i32 = arith.constant 0 : i32
    %c0_i32_0 = arith.constant 0 : i32
    return %1, %c0_i32 : i32, i32
  }
  func.func @transform_3(%arg0: i32, %arg1: i32) -> (i32, i32) {
    %c1_i32 = arith.constant 1 : i32
    %0 = arith.muli %arg0, %c1_i32 : i32
    %1 = arith.addi %0, %arg1 : i32
    %c0_i32 = arith.constant 0 : i32
    %c0_i32_0 = arith.constant 0 : i32
    return %1, %c0_i32 : i32, i32
  }
  func.func @transform_4(%arg0: i32, %arg1: i32) -> (i32, i32) {
    %c1_i32 = arith.constant 1 : i32
    %0 = arith.muli %arg0, %c1_i32 : i32
    %1 = arith.addi %0, %arg1 : i32
    %c0_i32 = arith.constant 0 : i32
    %c0_i32_0 = arith.constant 0 : i32
    return %1, %c0_i32 : i32, i32
  }
  func.func @transform_5(%arg0: i32, %arg1: i32) -> (i32, i32, i32) {
    %c0_i32 = arith.constant 0 : i32
    %c0_i32_0 = arith.constant 0 : i32
    %c0_i32_1 = arith.constant 0 : i32
    return %arg0, %c0_i32, %c0_i32_0 : i32, i32, i32
  }
}

</mosaic_0001>

<llo_original>
// kernel: tpu_custom_call.1
$region0: #{tpu_custom_call.1}
  #allocation0 [shape = 'u32[]', space=smem, size = 0x4, offset = 0x4, fixed_abs, tag = 'smem constant byte address 0x4 - core index']
  #allocation1 [shape = 'u32[72,128]{1,0:T(1,128)}', space=vmem, size = 0x9000, scoped, tag = 'internal scratch']
  #allocation2 [shape = 'f32[8,128]{1,0:T(8,128)}', space=vmem, size = 0x1000, scoped, tag = 'scratch operand']
  %s0 = inlined_call_operand.hbm [shape: f32[4], index: 0, kind: input, shape index: {}]
  %s1 = inlined_call_operand.hbm [shape: f32[32,128], index: 1, kind: input, shape index: {}]
  %s2 = inlined_call_operand.hbm [shape: f32[32,128], index: 2, kind: input, shape index: {}]
  %s3 = inlined_call_operand.hbm [shape: f32[32,128], index: 3, kind: input, shape index: {}]
  %s4 = inlined_call_operand.hbm [shape: f32[32,128], index: 4, kind: output, shape index: {0}]
  %s5 = inlined_call_operand.hbm [shape: f32[1,8,128], index: 5, kind: output, shape index: {1}]
  %6 = xla_tuple %s4, %s5
  %s7 = sld [smem:[#allocation0]]
  $region58: #{tpu_custom_call.1} parent=0
    _
  %s9 = ssub.s32 1, %s7
  %s10 = scalar_select 0, %s9, %s7
  $region1: #{tpu_custom_call.1} parent=0
    #allocation3 [shape = 'u8[512]{0}', space=smem, size = 0x200, scoped, tag = 'input window, operand 0, single buffered']
    #allocation4 [shape = 's32[1]{0}', space=sflag, size = 0x4, scoped, tag = 'scoped memory for tpu_custom_call.1']
    #allocation5 [shape = 's32[1]{0}', space=sflag, size = 0x4, scoped, tag = 'scoped memory for tpu_custom_call.1']
    #allocation6 [shape = 's32[1]{0}', space=sflag, size = 0x4, scoped, tag = 'scoped memory for tpu_custom_call.1']
    #allocation7 [shape = 'u8[16384]{0}', space=vmem, size = 0x4000, scoped, tag = 'input window, operand 1, single buffered']
    #allocation8 [shape = 'u8[16384]{0}', space=vmem, size = 0x4000, scoped, tag = 'input window, operand 2, single buffered']
    #allocation9 [shape = 's32[1]{0}', space=sflag, size = 0x4, scoped, tag = 'scoped memory for tpu_custom_call.1']
    #allocation10 [shape = 'u8[16384]{0}', space=vmem, size = 0x4000, scoped, tag = 'input window, operand 3, single buffered']
    #allocation11 [shape = 'u8[16384]{0}', space=vmem, size = 0x4000, scoped, tag = 'output window, operand 0, single buffered']
    #allocation12 [shape = 'u8[4096]{0}', space=vmem, size = 0x1000, scoped, tag = 'output window, operand 1, single buffered']
    #allocation13 [shape = 's32[1]{0}', space=sflag, size = 0x4, scoped, tag = 'scoped memory for tpu_custom_call.1']
    %11 = vsyncpa [#allocation6], 0
    %12 = vsyncpa [#allocation4], 0
    %13 = vsyncpa [#allocation9], 0
    %14 = vsyncpa [#allocation5], 0
    %15 = vsyncpa [#allocation13], 0
    // Predicated region
    $region2: #{tpu_custom_call.1} parent=1 // pred_check
      _
    $region3: #{tpu_custom_call.1} parent=1 // pred_check_branch
      %17 = sbr.rel (0) target = $region5
    $region4: #{tpu_custom_call.1} parent=1 // pred_region
      %19 = vsyncadd [#allocation6], 0
      %s21 = sshll.u32 %s0, 4
      %s22 = int_to_ptr.hbm [resolvable:$true] %s21
      %24 = dma.hbm_to_smem %s22, 16, [#allocation3], [#allocation6]
    $region5: #{tpu_custom_call.1} parent=1 // pred_fallthru
      _
    // Predicated region
    $region6: #{tpu_custom_call.1} parent=1 // pred_check
      _
    $region7: #{tpu_custom_call.1} parent=1 // pred_check_branch
      %26 = sbr.rel (0) target = $region9
    $region8: #{tpu_custom_call.1} parent=1 // pred_region
      %s27 = sadd.s32 0, 0
      %s28 = smul.u32 4, %s27
      %30 = vsyncadd [#allocation4], 0
      %s31 = smul.addr %s28, 8
      %s32 = scalar_lea.hbm %s1, %s31
      %s33 = sshll.u32 %s32, 4
      %s34 = int_to_ptr.hbm [resolvable:$true] %s33
      %s35 = sshll.u32 [#allocation7], 4
      %s36 = int_to_ptr.vmem [resolvable:$true] %s35
      %41 = dma.hbm_to_vmem [thread:$0]  %s34, 512, %s36, [#allocation4], 128, 128, 8
    $region9: #{tpu_custom_call.1} parent=1 // pred_fallthru
      _
    // Predicated region
    $region10: #{tpu_custom_call.1} parent=1 // pred_check
      _
    $region11: #{tpu_custom_call.1} parent=1 // pred_check_branch
      %43 = sbr.rel (0) target = $region13
    $region12: #{tpu_custom_call.1} parent=1 // pred_region
      %s44 = sadd.s32 0, 0
      %s45 = smul.u32 4, %s44
      %47 = vsyncadd [#allocation9], 0
      %s48 = smul.addr %s45, 8
      %s49 = scalar_lea.hbm %s2, %s48
      %s50 = sshll.u32 %s49, 4
      %s51 = int_to_ptr.hbm [resolvable:$true] %s50
      %s52 = sshll.u32 [#allocation8], 4
      %s53 = int_to_ptr.vmem [resolvable:$true] %s52
      %58 = dma.hbm_to_vmem [thread:$0]  %s51, 512, %s53, [#allocation9], 128, 128, 8
    $region13: #{tpu_custom_call.1} parent=1 // pred_fallthru
      _
    // Predicated region
    $region14: #{tpu_custom_call.1} parent=1 // pred_check
      _
    $region15: #{tpu_custom_call.1} parent=1 // pred_check_branch
      %60 = sbr.rel (0) target = $region17
    $region16: #{tpu_custom_call.1} parent=1 // pred_region
      %s61 = sadd.s32 0, 0
      %s62 = smul.u32 4, %s61
      %64 = vsyncadd [#allocation9], 0
      %s65 = smul.addr %s62, 8
      %s66 = scalar_lea.hbm %s3, %s65
      %s67 = sshll.u32 %s66, 4
      %s68 = int_to_ptr.hbm [resolvable:$true] %s67
      %s69 = sshll.u32 [#allocation10], 4
      %s70 = int_to_ptr.vmem [resolvable:$true] %s69
      %75 = dma.hbm_to_vmem [thread:$0]  %s68, 512, %s70, [#allocation9], 128, 128, 8
    $region17: #{tpu_custom_call.1} parent=1 // pred_fallthru
      _
    // Predicated region
    $region18: #{tpu_custom_call.1} parent=1 // pred_check
      _
    $region19: #{tpu_custom_call.1} parent=1 // pred_check_branch
      %77 = sbr.rel (0) target = $region21
    $region20: #{tpu_custom_call.1} parent=1 // pred_region
      %79 = dma.done [#allocation6], 16
    $region21: #{tpu_custom_call.1} parent=1 // pred_fallthru
      _
    // Predicated region
    $region22: #{tpu_custom_call.1} parent=1 // pred_check
      _
    $region23: #{tpu_custom_call.1} parent=1 // pred_check_branch
      %81 = sbr.rel (0) target = $region25
    $region24: #{tpu_custom_call.1} parent=1 // pred_region
      %83 = dma.done [#allocation4], 512
    $region25: #{tpu_custom_call.1} parent=1 // pred_fallthru
      _
    // Predicated region
    $region26: #{tpu_custom_call.1} parent=1 // pred_check
      _
    $region27: #{tpu_custom_call.1} parent=1 // pred_check_branch
      %85 = sbr.rel (0) target = $region29
    $region28: #{tpu_custom_call.1} parent=1 // pred_region
      %87 = dma.done [#allocation9], 512
    $region29: #{tpu_custom_call.1} parent=1 // pred_fallthru
      _
    // Predicated region
    $region30: #{tpu_custom_call.1} parent=1 // pred_check
      _
    $region31: #{tpu_custom_call.1} parent=1 // pred_check_branch
      %89 = sbr.rel (0) target = $region33
    $region32: #{tpu_custom_call.1} parent=1 // pred_region
      %91 = dma.done [#allocation9], 512
    $region33: #{tpu_custom_call.1} parent=1 // pred_fallthru
      _
    %92 = sfence
    %s93 = sadd.s32 0, 0
    %s94 = smul.u32 4, %s93
    %s95 = sadd.s32 0, 0
    %s96 = smul.u32 4, %s95
    %s97 = sadd.s32 0, 0
    %s98 = smul.u32 4, %s97
    %s99 = sadd.s32 0, 0
    %s100 = smul.u32 4, %s99
    %p101 = scmp.eq.s32.totalorder 0, 0
    // Predicated region
    $region34: #{tpu_custom_call.1} parent=1 // pred_check
      %p102 = pneg %p101
    $region35: #{tpu_custom_call.1} parent=1 // pred_check_branch
      %104 = sbr.rel (%p102) target = $region37
    $region36: #{tpu_custom_call.1} parent=1 // pred_region
      %105 = vst [vmem:[#allocation2] sm:$0xff] 0.0
    $region37: #{tpu_custom_call.1} parent=1 // pred_fallthru
      _
    %v106 = vld [vmem:[#allocation7] sm:$0xff]
    %v107 = vld [vmem:[#allocation7 + $0x8] sm:$0xff]
    %v108 = vld [vmem:[#allocation7 + $0x10] sm:$0xff]
    %v109 = vld [vmem:[#allocation7 + $0x18] sm:$0xff]
    %v110 = vld [vmem:[#allocation8] sm:$0xff]
    %v111 = vld [vmem:[#allocation8 + $0x8] sm:$0xff]
    %v112 = vld [vmem:[#allocation8 + $0x10] sm:$0xff]
    %v113 = vld [vmem:[#allocation8 + $0x18] sm:$0xff]
    %vm114 = vcmp.gt.f32.partialorder %v110, 20.0
    %vm115 = vcmp.gt.f32.partialorder %v111, 20.0
    %vm116 = vcmp.gt.f32.partialorder %v112, 20.0
    %vm117 = vcmp.gt.f32.partialorder %v113, 20.0
    %v118 = vmin.f32 %v110, 20.0
    %v119 = vmin.f32 %v111, 20.0
    %v120 = vmin.f32 %v112, 20.0
    %v121 = vmin.f32 %v113, 20.0
    %v122 = vmul.f32 %v118, 1.442695
    %v123 = vpow.pop %v122
    %v124 = vmul.f32 %v119, 1.442695
    %v125 = vpow.pop %v124
    %v126 = vmul.f32 %v120, 1.442695
    %v127 = vpow.pop %v126
    %v128 = vmul.f32 %v121, 1.442695
    %v129 = vpow.pop %v128
    %v130 = vadd.f32 %v123, 1.0
    %v131 = vlog2.pop %v130
    %v132 = vmul.f32 %v131, 0.6931472
    %v133 = vmul.f32 -0.5, %v123
    %v134 = vadd.f32 %v133, 1.0
    %v135 = vmul.f32 %v134, %v123
    %v136 = vand.u32 2147483647, %v123
    %vm137 = vcmp.lt.f32.partialorder %v136, 0.0004427343
    %v138 = vsel %vm137, %v135, %v132
    %v139 = vadd.f32 %v125, 1.0
    %v140 = vlog2.pop %v139
    %v141 = vmul.f32 %v140, 0.6931472
    %v142 = vmul.f32 -0.5, %v125
    %v143 = vadd.f32 %v142, 1.0
    %v144 = vmul.f32 %v143, %v125
    %v145 = vand.u32 2147483647, %v125
    %vm146 = vcmp.lt.f32.partialorder %v145, 0.0004427343
    %v147 = vsel %vm146, %v144, %v141
    %v148 = vadd.f32 %v127, 1.0
    %v149 = vlog2.pop %v148
    %v150 = vmul.f32 %v149, 0.6931472
    %v151 = vmul.f32 -0.5, %v127
    %v152 = vadd.f32 %v151, 1.0
    %v153 = vmul.f32 %v152, %v127
    %v154 = vand.u32 2147483647, %v127
    %vm155 = vcmp.lt.f32.partialorder %v154, 0.0004427343
    %v156 = vsel %vm155, %v153, %v150
    %v157 = vadd.f32 %v129, 1.0
    %v158 = vlog2.pop %v157
    %v159 = vmul.f32 %v158, 0.6931472
    %v160 = vmul.f32 -0.5, %v129
    %v161 = vadd.f32 %v160, 1.0
    %v162 = vmul.f32 %v161, %v129
    %v163 = vand.u32 2147483647, %v129
    %vm164 = vcmp.lt.f32.partialorder %v163, 0.0004427343
    %v165 = vsel %vm164, %v162, %v159
    %v166 = vsel %vm114, %v110, %v138
    %v167 = vsel %vm115, %v111, %v147
    %v168 = vsel %vm116, %v112, %v156
    %v169 = vsel %vm117, %v113, %v165
    %v170 = vld [vmem:[#allocation10] sm:$0xff]
    %v171 = vld [vmem:[#allocation10 + $0x8] sm:$0xff]
    %v172 = vld [vmem:[#allocation10 + $0x10] sm:$0xff]
    %v173 = vld [vmem:[#allocation10 + $0x18] sm:$0xff]
    %v174 = vmul.f32 %v166, %v170
    %v175 = vmul.f32 %v167, %v171
    %v176 = vmul.f32 %v168, %v172
    %v177 = vmul.f32 %v169, %v173
    %v178 = vadd.f32 %v106, %v174
    %v179 = vadd.f32 %v107, %v175
    %v180 = vadd.f32 %v108, %v176
    %v181 = vadd.f32 %v109, %v177
    %182 = vst [vmem:[#allocation11] sm:$0xff] %v178
    %183 = vst [vmem:[#allocation11 + $0x8] sm:$0xff] %v179
    %184 = vst [vmem:[#allocation11 + $0x10] sm:$0xff] %v180
    %185 = vst [vmem:[#allocation11 + $0x18] sm:$0xff] %v181
    %s186 = sld [smem:[#allocation3]]
    %s187 = sld [smem:[#allocation3 + $0x2]]
    %s188 = sld [smem:[#allocation3 + $0x3]]
    %v189 = vstv %s186
    %v190 = vsub.f32 %v106, %v189
    %v191 = vsub.f32 %v107, %v189
    %v192 = vsub.f32 %v108, %v189
    %v193 = vsub.f32 %v109, %v189
    %v194 = vlog2.pop %v166
    %v195 = vmul.f32 %v194, 0.6931472
    %v196 = vlog2.pop %v167
    %v197 = vmul.f32 %v196, 0.6931472
    %v198 = vlog2.pop %v168
    %v199 = vmul.f32 %v198, 0.6931472
    %v200 = vlog2.pop %v169
    %v201 = vmul.f32 %v200, 0.6931472
    %v202 = vstv %s187
    %v203 = vsub.f32 %v202, %v195
    %v204 = vsub.f32 %v202, %v197
    %v205 = vsub.f32 %v202, %v199
    %v206 = vsub.f32 %v202, %v201
    %v207 = vmul.f32 %v166, %v166
    %v208 = vmul.f32 %v167, %v167
    %v209 = vmul.f32 %v168, %v168
    %v210 = vmul.f32 %v169, %v169
    %v211 = vmul.f32 %v190, %v190
    %v212 = vmul.f32 %v191, %v191
    %v213 = vmul.f32 %v192, %v192
    %v214 = vmul.f32 %v193, %v193
    %v215 = vadd.f32 %v207, %v211
    %v216 = vadd.f32 %v208, %v212
    %v217 = vadd.f32 %v209, %v213
    %v218 = vadd.f32 %v210, %v214
    %v219 = vstv %s188
    %v220 = vmul.f32 %v215, %v219
    %v221 = vmul.f32 %v216, %v219
    %v222 = vmul.f32 %v217, %v219
    %v223 = vmul.f32 %v218, %v219
    %v224 = vadd.f32 %v203, %v220
    %v225 = vadd.f32 %v204, %v221
    %v226 = vadd.f32 %v205, %v222
    %v227 = vadd.f32 %v206, %v223
    %v228 = vsub.f32 %v224, 0.5
    %v229 = vsub.f32 %v225, 0.5
    %v230 = vsub.f32 %v226, 0.5
    %v231 = vsub.f32 %v227, 0.5
    %v232 = vadd.f32 %v228, %v229
    %v233 = vadd.f32 %v232, %v230
    %v234 = vadd.f32 %v233, %v231
    %v235 = vld [vmem:[#allocation2] sm:$0xff]
    %v236 = vadd.f32 %v235, %v234
    %237 = vst [vmem:[#allocation2] sm:$0xff] %v236
    // Predicated region
    $region38: #{tpu_custom_call.1} parent=1 // pred_check
      %p238 = pneg %p101
    $region39: #{tpu_custom_call.1} parent=1 // pred_check_branch
      %240 = sbr.rel (%p238) target = $region41
    $region40: #{tpu_custom_call.1} parent=1 // pred_region
      %v241 = vld [vmem:[#allocation2] sm:$0xff]
      %242 = vst [vmem:[#allocation12] sm:$0xff] %v241
    $region41: #{tpu_custom_call.1} parent=1 // pred_fallthru
      _
    // Predicated region
    $region42: #{tpu_custom_call.1} parent=1 // pred_check
      _
    $region43: #{tpu_custom_call.1} parent=1 // pred_check_branch
      %244 = sbr.rel (0) target = $region45
    $region44: #{tpu_custom_call.1} parent=1 // pred_region
      %s245 = sadd.s32 0, 0
      %s246 = smul.u32 4, %s245
      %248 = vsyncadd [#allocation5], 0
      %s249 = smul.addr %s246, 8
      %s250 = scalar_lea.hbm %s4, %s249
      %s251 = sshll.u32 [#allocation11], 4
      %s252 = int_to_ptr.vmem [resolvable:$true] %s251
      %s253 = sshll.u32 %s250, 4
      %s254 = int_to_ptr.hbm [resolvable:$true] %s253
      %259 = dma.vmem_to_hbm [thread:$0]  %s252, 512, %s254, [#allocation5], 128, 128, 8
    $region45: #{tpu_custom_call.1} parent=1 // pred_fallthru
      _
    // Predicated region
    $region46: #{tpu_custom_call.1} parent=1 // pred_check
      _
    $region47: #{tpu_custom_call.1} parent=1 // pred_check_branch
      %261 = sbr.rel (0) target = $region49
    $region48: #{tpu_custom_call.1} parent=1 // pred_region
      %263 = vsyncadd [#allocation13], 0
      %s265 = sshll.u32 [#allocation12], 4
      %s266 = int_to_ptr.vmem [resolvable:$true] %s265
      %s267 = sshll.u32 %s5, 4
      %s268 = int_to_ptr.hbm [resolvable:$true] %s267
      %270 = dma.vmem_to_hbm [thread:$0]  %s266, 128, %s268, [#allocation13]
    $region49: #{tpu_custom_call.1} parent=1 // pred_fallthru
      _
    // Predicated region
    $region50: #{tpu_custom_call.1} parent=1 // pred_check
      _
    $region51: #{tpu_custom_call.1} parent=1 // pred_check_branch
      %272 = sbr.rel (0) target = $region53
    $region52: #{tpu_custom_call.1} parent=1 // pred_region
      %274 = dma.done [#allocation5], 512
    $region53: #{tpu_custom_call.1} parent=1 // pred_fallthru
      _
    // Predicated region
    $region54: #{tpu_custom_call.1} parent=1 // pred_check
      _
    $region55: #{tpu_custom_call.1} parent=1 // pred_check_branch
      %276 = sbr.rel (0) target = $region57
    $region56: #{tpu_custom_call.1} parent=1 // pred_region
      %278 = dma.done [#allocation13], 128
    $region57: #{tpu_custom_call.1} parent=1 // pred_fallthru
      _
    %279 = vsyncpa [#allocation4], 1
    %280 = vsyncpa [#allocation9], 1
    %281 = vsyncpa [#allocation5], 1
    %282 = vsyncpa [#allocation13], 1
    %283 = vsyncpa [#allocation6], 1

</llo_original>
